<compile_context>
chip_gen: v5e
topology: v5e:2x2
jax: 0.10.0
libtpu: 0.0.40
codegen_flags: <defaults>
</compile_context>

<pallas_src>
import math

import jax
import jax.numpy as jnp
from jax import lax
from jax.experimental import pallas as pl
from jax.experimental.pallas import tpu as pltpu

_EPS = 1e-12           # torch F.normalize default eps
_EPS2 = _EPS * _EPS    # clamp on the sum of squares (== clamping the norm at eps)


def _cosine_linear_kernel(xn_ref, w_ref, wnorm_ref, cos_ref):
    # xn_ref: (B, Fin)       pre-normalized input rows, VMEM-resident across the whole grid.
    # w_ref : (Fin, TILE_N)  one un-normalized weight column tile per grid step.
    w = w_ref[...]

    # Column-wise inverse L2 norm of this weight tile:
    #   1 / max(||w_col||, eps) == rsqrt(max(sum(w_col^2), eps^2))   (EUP rsqrt, XLU reduce)
    w_inv = lax.rsqrt(jnp.maximum(jnp.sum(w * w, axis=0, keepdims=True), _EPS2))  # (1, TILE_N)

    # MXU matmul on the un-normalized weight; fold the column normalization into a cheap
    # (B, TILE_N) scale afterwards (algebraically identical, far fewer scaled elements).
    cos_ref[...] = jnp.dot(xn_ref[...], w, preferred_element_type=jnp.float32) * w_inv

    # Normalized-weight output: one multiply per element (cast only if the caller asked
    # for a narrower storage dtype).
    wnorm_ref[...] = (w * w_inv).astype(wnorm_ref.dtype)


def _round_up(v, m):
    return (v + m - 1) // m * m


def _vmem_budget():
    """(vmem_limit_bytes for the compiler, byte budget for the double-buffered tiles)."""
    try:
        cap = int(pltpu.get_tpu_info().vmem_capacity_bytes)   # 128 MiB v5e/v6e, 64 MiB v7x/TC
    except Exception:
        cap = 64 * 1024 * 1024                                # conservative fallback (v7x)
    vmem_limit = int(cap * 0.75)        # leave headroom for compiler-internal scratch
    tile_budget = int(vmem_limit * 0.85)
    return vmem_limit, tile_budget


def _pick_tile_n(b, fin, fout, budget_bytes):
    """Lane-dense column tile sized from the per-generation VMEM budget.

    Per-step f32 working set (double-buffered by the Pallas pipeline):
      resident x_n block : 2 * 4 * B * Fin        (counted double-buffered, conservative)
      weight tile        : 2 * 4 * Fin * tile_n
      w_n output tile    : 2 * 4 * Fin * tile_n
      cos output tile    : 2 * 4 * B   * tile_n
    """
    fout128 = _round_up(fout, 128)
    fixed = 2 * 4 * b * fin
    per_col = 2 * 4 * (2 * fin + b)
    avail = max(budget_bytes - fixed, per_col * 128)
    max_cols = max(128, (avail // per_col) // 128 * 128)
    # TODO(synk): for extreme Fin (>= ~24-32K) even a 128-wide tile no longer double-buffers in
    # VMEM; that regime needs a second "arbitrary" grid axis over Fin with an accumulated
    # column sum-of-squares (two-pass for w_n) -- not implemented here.

    # v7x megacore: when there is enough width, force >= 2 Fout tiles so both TensorCores
    # drive their own DMA stream under dimension_semantics=("parallel",).
    if fout128 >= 256:
        max_cols = min(max_cols, max(128, (fout128 // 2) // 128 * 128))

    cap = min(max_cols, fout128)
    # Among 128-multiples within budget, minimize padding (padded columns are wasted HBM
    # bytes on a bandwidth-bound op), tie-breaking toward wider tiles (fewer grid steps).
    best = 128
    for t in range(256, cap + 1, 128):
        if _round_up(fout128, t) <= _round_up(fout128, best):
            best = t
    return best


def cosine_linear(x, weight, *, tile_n=None, w_out_dtype=jnp.float32):
    """x: (B, in_features), weight: (in_features, out_features) -> (w_norm, cos_theta).

    w_out_dtype: storage dtype of the normalized-weight output.  The reference module returns
    float32 (default); pass jnp.bfloat16 to cut ~25% of HBM traffic if the caller tolerates it.
    The sum-of-squares, rsqrt and matmul accumulation always stay f32.
    """
    x = jnp.asarray(x, jnp.float32)
    weight = jnp.asarray(weight, jnp.float32)
    B, fin = x.shape
    fin_w, fout = weight.shape
    assert fin == fin_w

    # Hoist the row normalization out of the per-tile body: done once here on B*Fin elements
    # instead of once per grid step inside the kernel.
    x_n = x * lax.rsqrt(jnp.maximum(jnp.sum(x * x, axis=-1, keepdims=True), _EPS2))

    vmem_limit, tile_budget = _vmem_budget()
    if tile_n is None:
        tile_n = _pick_tile_n(B, fin, fout, tile_budget)

    # Pad out_features to a multiple of the tile so every block is full & lane-dense.
    # Zero pad columns are harmless (inv-norm clamps at 1/eps, 0 * 1e12 == 0; sliced away below).
    fout_p = _round_up(fout, tile_n)
    w_in = weight if fout_p == fout else jnp.pad(weight, ((0, 0), (0, fout_p - fout)))

    grid = (fout_p // tile_n,)

    cost = pl.CostEstimate(
        flops=2 * B * fin * fout_p + 3 * fin * fout_p + B * fout_p,
        transcendentals=fout_p,
        bytes_accessed=4 * (B * fin + fin * fout_p + B * fout_p)
        + jnp.dtype(w_out_dtype).itemsize * fin * fout_p,
    )

    w_n, cos = pl.pallas_call(
        _cosine_linear_kernel,
        out_shape=(
            jax.ShapeDtypeStruct((fin, fout_p), w_out_dtype),   # normalized weight
            jax.ShapeDtypeStruct((B, fout_p), jnp.float32),     # cos_theta
        ),
        grid=grid,
        in_specs=[
            pl.BlockSpec((B, fin), lambda j: (0, 0)),           # x_n resident across the grid
            pl.BlockSpec((fin, tile_n), lambda j: (0, j)),      # stream weight column tiles
        ],
        out_specs=(
            pl.BlockSpec((fin, tile_n), lambda j: (0, j)),
            pl.BlockSpec((B, tile_n), lambda j: (0, j)),
        ),
        compiler_params=pltpu.CompilerParams(
            dimension_semantics=("parallel",),                  # shard Fout tiles across TCs
            vmem_limit_bytes=vmem_limit,                        # sized with the tile budget
        ),
        cost_estimate=cost,
    )(x_n, w_in)

    if fout_p != fout:
        w_n = w_n[:, :fout]
        cos = cos[:, :fout]
    return w_n, cos


def _xavier_uniform(key, in_features, out_features):
    # torch.nn.init.xavier_uniform_ on a (in_features, out_features) tensor.
    bound = math.sqrt(6.0 / (in_features + out_features))
    return jax.random.uniform(
        key, (in_features, out_features), dtype=jnp.float32, minval=-bound, maxval=bound
    )


def _reference(x, w):
    x_n = x / jnp.maximum(jnp.linalg.norm(x, axis=-1, keepdims=True), _EPS)
    w_n = w / jnp.maximum(jnp.linalg.norm(w, axis=0, keepdims=True), _EPS)
    return w_n, x_n @ w_n


if __name__ == "__main__":
    key = jax.random.PRNGKey(0)
    k_x, k_w1, k_w2 = jax.random.split(key, 3)

    B, in_features = 8, 32
    x = jax.random.normal(k_x, (B, in_features), dtype=jnp.float32)

    # Case 1: Fout a multiple of the tile -> multi-step grid, no padding (explicit tile).
    w1 = _xavier_uniform(k_w1, in_features, 384)
    wn1, cos1 = cosine_linear(x, w1, tile_n=128)

    # Case 2: ragged Fout -> auto tile pick, wrapper pads and slices the outputs back.
    w2 = _xavier_uniform(k_w2, in_features, 200)
    wn2, cos2 = cosine_linear(x, w2)

    jax.block_until_ready((wn1, cos1, wn2, cos2))

    for wn, cos, w in ((wn1, cos1, w1), (wn2, cos2, w2)):
        wr, cr = _reference(x, w)
        assert jnp.allclose(wn, wr, atol=1e-5), "w_norm mismatch"
        assert jnp.allclose(cos, cr, atol=1e-4), "cos_theta mismatch"

    print("KERNEL_OK")
</pallas_src>

<mosaic_0001>
module attributes {stable_mosaic.version = 11 : i64} {
  func.func @_cosine_linear_kernel(%arg0: i32, %arg1: memref<8x32xf32, #tpu.memory_space<vmem>>, %arg2: memref<32x128xf32, #tpu.memory_space<vmem>>, %arg3: memref<32x128xf32, #tpu.memory_space<vmem>>, %arg4: memref<8x128xf32, #tpu.memory_space<vmem>>) attributes {dimension_semantics = [#tpu.dimension_semantics<parallel>], iteration_bounds = array<i64: 3>, scalar_prefetch = 0 : i64, scratch_operands = 0 : i64, tpu.core_type = #tpu.core_type<tc>, window_params = [{pipeline_mode = #tpu.pipeline_mode<synchronous>, transform_indices = @transform_0, window_bounds = array<i64: 8, 32>}, {transform_indices = @transform_1, window_bounds = array<i64: 32, 128>}, {transform_indices = @transform_2, window_bounds = array<i64: 32, 128>}, {transform_indices = @transform_3, window_bounds = array<i64: 8, 128>}]} {
    %c0 = arith.constant 0 : index
    %c0_0 = arith.constant 0 : index
    %0 = vector.load %arg2[%c0, %c0_0] : memref<32x128xf32, #tpu.memory_space<vmem>>, vector<32x128xf32>
    %1 = arith.mulf %0, %0 : vector<32x128xf32>
    %cst = arith.constant dense<0.000000e+00> : vector<128xf32>
    %2 = vector.multi_reduction <add>, %1, %cst [0] : vector<32x128xf32> to vector<128xf32>
    %3 = vector.shape_cast %2 : vector<128xf32> to vector<1x128xf32>
    %cst_1 = arith.constant 1.000000e-24 : f32
    %4 = vector.broadcast %cst_1 : f32 to vector<1x128xf32>
    %5 = arith.maximumf %3, %4 : vector<1x128xf32>
    %6 = math.rsqrt %5 : vector<1x128xf32>
    %c0_2 = arith.constant 0 : index
    %c0_3 = arith.constant 0 : index
    %7 = vector.load %arg1[%c0_2, %c0_3] : memref<8x32xf32, #tpu.memory_space<vmem>>, vector<8x32xf32>
    %cst_4 = arith.constant dense<0.000000e+00> : vector<8x128xf32>
    %8 = tpu.matmul %7, %0, %cst_4 {dimension_numbers = #tpu.dot_dimension_numbers<[1], [0], [0], [1], [0, 0, 1, 1], [], []>} : vector<8x32xf32>, vector<32x128xf32>, vector<8x128xf32> -> vector<8x128xf32>
    %9 = vector.broadcast %6 : vector<1x128xf32> to vector<8x128xf32>
    %10 = arith.mulf %8, %9 : vector<8x128xf32>
    %c0_5 = arith.constant 0 : index
    %c0_6 = arith.constant 0 : index
    %11 = vector.load %arg4[%c0_5, %c0_6] : memref<8x128xf32, #tpu.memory_space<vmem>>, vector<8x128xf32>
    tpu.vector_store %arg4[%c0_5, %c0_6], %10 {strides = array<i32>} : memref<8x128xf32, #tpu.memory_space<vmem>>, vector<8x128xf32>,
    %12 = vector.broadcast %6 : vector<1x128xf32> to vector<32x128xf32>
    %13 = arith.mulf %0, %12 : vector<32x128xf32>
    %c0_7 = arith.constant 0 : index
    %c0_8 = arith.constant 0 : index
    %14 = vector.load %arg3[%c0_7, %c0_8] : memref<32x128xf32, #tpu.memory_space<vmem>>, vector<32x128xf32>
    tpu.vector_store %arg3[%c0_7, %c0_8], %13 {strides = array<i32>} : memref<32x128xf32, #tpu.memory_space<vmem>>, vector<32x128xf32>,
    return
  }
  func.func @transform_0(%arg0: i32) -> (i32, i32) {
    %c0_i32 = arith.constant 0 : i32
    %c0_i32_0 = arith.constant 0 : i32
    %c0_i32_1 = arith.constant 0 : i32
    return %c0_i32, %c0_i32_0 : i32, i32
  }
  func.func @transform_1(%arg0: i32) -> (i32, i32) {
    %c0_i32 = arith.constant 0 : i32
    %c0_i32_0 = arith.constant 0 : i32
    return %c0_i32, %arg0 : i32, i32
  }
  func.func @transform_2(%arg0: i32) -> (i32, i32) {
    %c0_i32 = arith.constant 0 : i32
    %c0_i32_0 = arith.constant 0 : i32
    return %c0_i32, %arg0 : i32, i32
  }
  func.func @transform_3(%arg0: i32) -> (i32, i32) {
    %c0_i32 = arith.constant 0 : i32
    %c0_i32_0 = arith.constant 0 : i32
    return %c0_i32, %arg0 : i32, i32
  }
}

</mosaic_0001>

<llo_original>
// kernel: tpu_custom_call.1
$region0: #{tpu_custom_call.1}
  #allocation0 [shape = 'u32[]', space=smem, size = 0x4, offset = 0x4, fixed_abs, tag = 'smem constant byte address 0x4 - core index']
  #allocation1 [shape = 'u32[72,128]{1,0:T(1,128)}', space=vmem, size = 0x9000, scoped, tag = 'internal scratch']
  %s0 = inlined_call_operand.hbm [shape: f32[8,32], index: 0, kind: input, shape index: {}]
  %s1 = inlined_call_operand.hbm [shape: f32[32,384], index: 1, kind: input, shape index: {}]
  %s2 = inlined_call_operand.hbm [shape: f32[32,384], index: 2, kind: output, shape index: {0}]
  %s3 = inlined_call_operand.hbm [shape: f32[8,384], index: 3, kind: output, shape index: {1}]
  %4 = xla_tuple %s2, %s3
  %s5 = sld [smem:[#allocation0]]
  $region57: #{tpu_custom_call.1} parent=0
    _
  %s7 = ssub.s32 1, %s5
  %s8 = scalar_select 0, %s7, %s5
  $region1: #{tpu_custom_call.1} parent=0
    #allocation2 [shape = 'u8[4096]{0}', space=vmem, size = 0x1000, scoped, tag = 'input window, operand 0, single buffered']
    #allocation3 [shape = 's32[2]{0}', space=sflag, size = 0x8, scoped, tag = 'scoped memory for tpu_custom_call.1']
    #allocation4 [shape = 's32[2]{0}', space=sflag, size = 0x8, scoped, tag = 'scoped memory for tpu_custom_call.1']
    #allocation5 [shape = 'u8[32768]{0}', space=vmem, size = 0x8000, scoped, tag = 'input window, operand 1']
    #allocation6 [shape = 's32[2]{0}', space=sflag, size = 0x8, scoped, tag = 'scoped memory for tpu_custom_call.1']
    #allocation7 [shape = 'u8[32768]{0}', space=vmem, size = 0x8000, scoped, tag = 'output window, operand 0']
    #allocation8 [shape = 'u8[8192]{0}', space=vmem, size = 0x2000, scoped, tag = 'output window, operand 1']
    #allocation9 [shape = 's32[2]{0}', space=sflag, size = 0x8, scoped, tag = 'scoped memory for tpu_custom_call.1']
    %9 = vsyncpa [#allocation3], 0
    %10 = vsyncpa [#allocation6], 0
    %s11 = scalar_lea.sflag [#allocation6], 1
    %12 = vsyncpa %s11, 0
    %13 = vsyncpa [#allocation4], 0
    %s14 = scalar_lea.sflag [#allocation4], 1
    %15 = vsyncpa %s14, 0
    %16 = vsyncpa [#allocation9], 0
    %s17 = scalar_lea.sflag [#allocation9], 1
    %18 = vsyncpa %s17, 0
    loop: start=0, step=1, limit=5
    $region2: #{tpu_custom_call.1} parent=1 // loop_pre_header
      _
    $region3: #{tpu_custom_call.1} parent=1 // loop_header
      %s20 = sphi 0, %s24
      %p21 = scmp.ge.s32.totalorder %s20, 5
      %s28 = sphi 0, %s28
      %s30 = sphi 0, %s28
      %s31 = sphi 0, %s30
      %s45 = sphi 0, %s31
      %s51 = sphi 0, %s53
      %s54 = sphi 0, %s51
      %s55 = sphi 0, %s54
      %s71 = sphi 0, %s55
      %s77 = sphi 0, %s79
      %s80 = sphi 0, %s77
      %s81 = sphi 0, %s80
      %s97 = sphi 0, %s81
      %s103 = sphi 0, %s105
      %s106 = sphi 0, %s103
      %s107 = sphi 0, %s106
      %s123 = sphi 0, %s107
    $region4: #{tpu_custom_call.1} parent=1 // loop_header_branch
      %23 = sbr.rel (%p21) target = $region8
    $region5: #{tpu_custom_call.1} parent=1 // loop_body
      %s25 = ssub.s32 %s20, 1
      %s26 = ssub.s32 %s20, 2
      %s27 = sadd.s32 %s20, 1
      %s29 = sadd.s32 %s28, 1
      %p32 = scmp.eq.s32.totalorder %s20, 2
      %p33 = scmp.ne.s32.totalorder %s28, %s30
      %p34 = scmp.eq.s32.totalorder %s20, 0
      %p35 = por %p33, %p34
      %p36 = scmp.ne.s32.totalorder %s28, %s30
      %p37 = scmp.eq.s32.totalorder %s25, 2
      %p38 = por %p36, %p37
      %p39 = scmp.ne.s32.totalorder %s30, %s31
      %p40 = scmp.eq.s32.totalorder %s25, 0
      %p41 = por %p39, %p40
      %p42 = scmp.ne.s32.totalorder %s30, %s31
      %p43 = scmp.eq.s32.totalorder %s26, 2
      %p44 = por %p42, %p43
      %p46 = scmp.ne.s32.totalorder %s31, %s45
      %p47 = scmp.eq.s32.totalorder %s26, 0
      %p48 = por %p46, %p47
      %s49 = ssub.s32 %s20, %s27
      %p50 = scmp.eq.s32.totalorder %s49, 0
      %s52 = sadd.s32 %s51, 1
      %s53 = scalar_select %p50, %s51, %s52
      %p56 = pneg %p50
      %p57 = scmp.eq.s32.totalorder %s20, 2
      %p58 = por %p56, %p57
      %p59 = scmp.ne.s32.totalorder %s51, %s54
      %p60 = scmp.eq.s32.totalorder %s20, 0
      %p61 = por %p59, %p60
      %p62 = scmp.ne.s32.totalorder %s51, %s54
      %p63 = scmp.eq.s32.totalorder %s25, 2
      %p64 = por %p62, %p63
      %p65 = scmp.ne.s32.totalorder %s54, %s55
      %p66 = scmp.eq.s32.totalorder %s25, 0
      %p67 = por %p65, %p66
      %p68 = scmp.ne.s32.totalorder %s54, %s55
      %p69 = scmp.eq.s32.totalorder %s26, 2
      %p70 = por %p68, %p69
      %p72 = scmp.ne.s32.totalorder %s55, %s71
      %p73 = scmp.eq.s32.totalorder %s26, 0
      %p74 = por %p72, %p73
      %s75 = ssub.s32 %s20, %s27
      %p76 = scmp.eq.s32.totalorder %s75, 0
      %s78 = sadd.s32 %s77, 1
      %s79 = scalar_select %p76, %s77, %s78
      %p82 = pneg %p76
      %p83 = scmp.eq.s32.totalorder %s20, 2
      %p84 = por %p82, %p83
      %p85 = scmp.ne.s32.totalorder %s77, %s80
      %p86 = scmp.eq.s32.totalorder %s20, 0
      %p87 = por %p85, %p86
      %p88 = scmp.ne.s32.totalorder %s77, %s80
      %p89 = scmp.eq.s32.totalorder %s25, 2
      %p90 = por %p88, %p89
      %p91 = scmp.ne.s32.totalorder %s80, %s81
      %p92 = scmp.eq.s32.totalorder %s25, 0
      %p93 = por %p91, %p92
      %p94 = scmp.ne.s32.totalorder %s80, %s81
      %p95 = scmp.eq.s32.totalorder %s26, 2
      %p96 = por %p94, %p95
      %p98 = scmp.ne.s32.totalorder %s81, %s97
      %p99 = scmp.eq.s32.totalorder %s26, 0
      %p100 = por %p98, %p99
      %s101 = ssub.s32 %s20, %s27
      %p102 = scmp.eq.s32.totalorder %s101, 0
      %s104 = sadd.s32 %s103, 1
      %s105 = scalar_select %p102, %s103, %s104
      %p108 = pneg %p102
      %p109 = scmp.eq.s32.totalorder %s20, 2
      %p110 = por %p108, %p109
      %p111 = scmp.ne.s32.totalorder %s103, %s106
      %p112 = scmp.eq.s32.totalorder %s20, 0
      %p113 = por %p111, %p112
      %p114 = scmp.ne.s32.totalorder %s103, %s106
      %p115 = scmp.eq.s32.totalorder %s25, 2
      %p116 = por %p114, %p115
      %p117 = scmp.ne.s32.totalorder %s106, %s107
      %p118 = scmp.eq.s32.totalorder %s25, 0
      %p119 = por %p117, %p118
      %p120 = scmp.ne.s32.totalorder %s106, %s107
      %p121 = scmp.eq.s32.totalorder %s26, 2
      %p122 = por %p120, %p121
      %p124 = scmp.ne.s32.totalorder %s107, %s123
      %p125 = scmp.eq.s32.totalorder %s26, 0
      %p126 = por %p124, %p125
      %p127 = scmp.le.s32.totalorder 1, %s20
      %p128 = scmp.lt.s32.totalorder %s20, 4
      %p129 = pnand %p127, %p128
      %p130 = pneg %p129
      // Predicated region
      $region9: #{tpu_custom_call.1} parent=5 // pred_check
        _
      $region10: #{tpu_custom_call.1} parent=5 // pred_check_branch
        %132 = sbr.rel (%p129) target = $region12
      $region11: #{tpu_custom_call.1} parent=5 // pred_region
        %s133 = ssub.s32 %s20, 1
        // Predicated region
        $region13: #{tpu_custom_call.1} parent=11 // pred_check
          %p134 = pneg %p41
        $region14: #{tpu_custom_call.1} parent=11 // pred_check_branch
          %136 = sbr.rel (%p134) target = $region16
        $region15: #{tpu_custom_call.1} parent=11 // pred_region
          %138 = vsyncadd [#allocation3], 0
          %s140 = sshll.u32 %s0, 4
          %s141 = int_to_ptr.hbm [resolvable:$true] %s140
          %s142 = sshll.u32 [#allocation2], 4
          %s143 = int_to_ptr.vmem [resolvable:$true] %s142
          %145 = dma.hbm_to_vmem [thread:$0]  %s141, 128, %s143, [#allocation3]
        $region16: #{tpu_custom_call.1} parent=11 // pred_fallthru
          _
      $region12: #{tpu_custom_call.1} parent=5 // pred_fallthru
        _
      %p146 = scmp.lt.s32.totalorder %s20, 3
      // Predicated region
      $region17: #{tpu_custom_call.1} parent=5 // pred_check
        %p147 = pneg %p146
      $region18: #{tpu_custom_call.1} parent=5 // pred_check_branch
        %149 = sbr.rel (%p147) target = $region20
      $region19: #{tpu_custom_call.1} parent=5 // pred_region
        // Predicated region
        $region21: #{tpu_custom_call.1} parent=19 // pred_check
          %p150 = pneg %p61
        $region22: #{tpu_custom_call.1} parent=19 // pred_check_branch
          %152 = sbr.rel (%p150) target = $region24
        $region23: #{tpu_custom_call.1} parent=19 // pred_region
          %s153 = sand.u32 %s51, 1
          %s154 = scalar_lea.sflag [#allocation6], %s153
          %s155 = sand.u32 %s51, 1
          %s156 = smul.addr %s155, 32
          %s157 = scalar_lea.vmem [#allocation5], %s156
          %159 = vsyncadd %s154, 0
          %s160 = smul.addr %s20, 8
          %s161 = scalar_lea.hbm %s1, %s160
          %s162 = sshll.u32 %s161, 4
          %s163 = int_to_ptr.hbm [resolvable:$true] %s162
          %s164 = sshll.u32 %s157, 4
          %s165 = int_to_ptr.vmem [resolvable:$true] %s164
          %170 = dma.hbm_to_vmem [thread:$0]  %s163, 512, %s165, %s154, 384, 128, 8
        $region24: #{tpu_custom_call.1} parent=19 // pred_fallthru
          _
      $region20: #{tpu_custom_call.1} parent=5 // pred_fallthru
        _
      %p171 = scmp.le.s32.totalorder 1, %s20
      %p172 = scmp.lt.s32.totalorder %s20, 4
      %p173 = pnand %p171, %p172
      %p174 = pneg %p173
      // Predicated region
      $region25: #{tpu_custom_call.1} parent=5 // pred_check
        _
      $region26: #{tpu_custom_call.1} parent=5 // pred_check_branch
        %176 = sbr.rel (%p173) target = $region28
      $region27: #{tpu_custom_call.1} parent=5 // pred_region
        %s177 = ssub.s32 %s20, 1
        // Predicated region
        $region29: #{tpu_custom_call.1} parent=27 // pred_check
          %p178 = pneg %p41
        $region30: #{tpu_custom_call.1} parent=27 // pred_check_branch
          %180 = sbr.rel (%p178) target = $region32
        $region31: #{tpu_custom_call.1} parent=27 // pred_region
          %182 = dma.done [#allocation3], 128
        $region32: #{tpu_custom_call.1} parent=27 // pred_fallthru
          _
        %s183 = sand.u32 %s54, 1
        %s184 = scalar_lea.sflag [#allocation6], %s183
        %s185 = sand.u32 %s54, 1
        %s186 = smul.addr %s185, 32
        %s187 = scalar_lea.vmem [#allocation5], %s186
        // Predicated region
        $region33: #{tpu_custom_call.1} parent=27 // pred_check
          %p188 = pneg %p67
        $region34: #{tpu_custom_call.1} parent=27 // pred_check_branch
          %190 = sbr.rel (%p188) target = $region36
        $region35: #{tpu_custom_call.1} parent=27 // pred_region
          %192 = dma.done %s184, 512
        $region36: #{tpu_custom_call.1} parent=27 // pred_fallthru
          _
        %p193 = pneg %p41
        %p194 = pneg %p38
        %s195 = sand.u32 %s54, 1
        %s196 = scalar_lea.sflag [#allocation6], %s195
        %s197 = sand.u32 %s54, 1
        %s198 = smul.addr %s197, 32
        %s199 = scalar_lea.vmem [#allocation5], %s198
        %p200 = pneg %p67
        %p201 = pneg %p64
        %p202 = pneg %p93
        %p203 = pneg %p90
        %s204 = sand.u32 %s80, 1
        %s205 = scalar_lea.sflag [#allocation4], %s204
        %s206 = sand.u32 %s80, 1
        %s207 = smul.addr %s206, 32
        %s208 = scalar_lea.vmem [#allocation7], %s207
        %p209 = pneg %p119
        %p210 = pneg %p116
        %s211 = sand.u32 %s106, 1
        %s212 = scalar_lea.sflag [#allocation9], %s211
        %s213 = sand.u32 %s106, 1
        %s214 = smul.addr %s213, 8
        %s215 = scalar_lea.vmem [#allocation8], %s214
        %v216 = vld [vmem:[%s187] sm:$0xff]
        %v217 = vld [vmem:[%s187 + $0x8] sm:$0xff]
        %v218 = vld [vmem:[%s187 + $0x10] sm:$0xff]
        %v219 = vld [vmem:[%s187 + $0x18] sm:$0xff]
        %v220 = vmul.f32 %v216, %v216
        %v221 = vmul.f32 %v217, %v217
        %v222 = vmul.f32 %v218, %v218
        %v223 = vmul.f32 %v219, %v219
        %v224 = vadd.f32 %v220, %v221
        %v225 = vadd.f32 %v224, %v222
        %v226 = vadd.f32 %v225, %v223
        %v227 = vrot.slane %v226, 4
        %v228 = vadd.f32 %v226, %v227
        %v229 = vrot.slane %v228, 2
        %v230 = vadd.f32 %v228, %v229
        %v231 = vrot.slane %v230, 1
        %v232 = vadd.f32 %v230, %v231
        %v233 = vmax.f32 %v232, 1e-24
        %v234 = vrsqrt.pop %v233
        %v235 = vmul.f32 %v234, %v233
        %v236 = vmul.f32 %v235, %v234
        %v237 = vmul.f32 0.5, %v236
        %v238 = vsub.f32 1.5, %v237
        %v239 = vmul.f32 %v234, %v238
        %vm240 = vweird.f32 %v233
        %vm241 = vweird.f32 %v234
        %vm242 = vmor %vm240, %vm241
        %v243 = vsel %vm242, %v234, %v239
        %v244 = vld [vmem:[#allocation2] sm:$0xff]
        %vm245 = vcmask 261120
        %v247 = vsel %vm245, %v244, 0
        %249 = vmatpush.msra.mxu0 0.0
        %250 = vmatpush.msra.mxu0 0.0
        %251 = vmatpush.msra.mxu0 0.0
        %252 = vmatpush.msra.mxu0 0.0
        %253 = vmatpush.msra.mxu0 0.0
        %254 = vmatpush.msra.mxu0 0.0
        %255 = vmatpush.msra.mxu0 0.0
        %256 = vmatpush.msra.mxu0 0.0
        %257 = vmatpush.msra.mxu0 0.0
        %258 = vmatpush.msra.mxu0 0.0
        %259 = vmatpush.msra.mxu0 0.0
        %260 = vmatpush.msra.mxu0 0.0
        %261 = vmatpush.msra.mxu0 %v219
        %262 = vmatpush.msra.mxu0 %v218
        %263 = vmatpush.msra.mxu0 %v217
        %264 = vmatpush.msra.mxu0 %v216
        %265 = vmatmul.f32.gmra.mxu0 %v247
        %v266 = vpop.f32.mrf.mxu0
        %v267 = vadd.f32 0.0, %v266
        %268 = vdwg.mxu0
        %v269 = vmul.f32 %v267, %v243
        %270 = vst [vmem:[%s215] sm:$0xff] %v269
        %v271 = vmul.f32 %v216, %v243
        %v272 = vmul.f32 %v217, %v243
        %v273 = vmul.f32 %v218, %v243
        %v274 = vmul.f32 %v219, %v243
        %275 = vst [vmem:[%s208] sm:$0xff] %v271
        %276 = vst [vmem:[%s208 + $0x8] sm:$0xff] %v272
        %277 = vst [vmem:[%s208 + $0x10] sm:$0xff] %v273
        %278 = vst [vmem:[%s208 + $0x18] sm:$0xff] %v274
        %s279 = sand.u32 %s80, 1
        %s280 = scalar_lea.sflag [#allocation4], %s279
        %s281 = sand.u32 %s80, 1
        %s282 = smul.addr %s281, 32
        %s283 = scalar_lea.vmem [#allocation7], %s282
        %s284 = sand.u32 %s106, 1
        %s285 = scalar_lea.sflag [#allocation9], %s284
        %s286 = sand.u32 %s106, 1
        %s287 = smul.addr %s286, 8
        %s288 = scalar_lea.vmem [#allocation8], %s287
        // Predicated region
        $region37: #{tpu_custom_call.1} parent=27 // pred_check
          %p289 = pneg %p90
        $region38: #{tpu_custom_call.1} parent=27 // pred_check_branch
          %291 = sbr.rel (%p289) target = $region40
        $region39: #{tpu_custom_call.1} parent=27 // pred_region
          %293 = vsyncadd %s280, 0
          %s294 = smul.addr %s25, 8
          %s295 = scalar_lea.hbm %s2, %s294
          %s296 = sshll.u32 %s283, 4
          %s297 = int_to_ptr.vmem [resolvable:$true] %s296
          %s298 = sshll.u32 %s295, 4
          %s299 = int_to_ptr.hbm [resolvable:$true] %s298
          %304 = dma.vmem_to_hbm [thread:$0]  %s297, 512, %s299, %s280, 128, 384, 8
        $region40: #{tpu_custom_call.1} parent=27 // pred_fallthru
          _
        // Predicated region
        $region41: #{tpu_custom_call.1} parent=27 // pred_check
          %p305 = pneg %p116
        $region42: #{tpu_custom_call.1} parent=27 // pred_check_branch
          %307 = sbr.rel (%p305) target = $region44
        $region43: #{tpu_custom_call.1} parent=27 // pred_region
          %309 = vsyncadd %s285, 0
          %s310 = smul.addr %s25, 8
          %s311 = scalar_lea.hbm %s3, %s310
          %s313 = sshll.u32 %s288, 4
          %s314 = int_to_ptr.vmem [resolvable:$true] %s313
          %s315 = sshll.u32 %s311, 4
          %s316 = int_to_ptr.hbm [resolvable:$true] %s315
          %318 = dma.vmem_to_hbm [thread:$0]  %s314, 128, %s316, %s285
        $region44: #{tpu_custom_call.1} parent=27 // pred_fallthru
          _
      $region28: #{tpu_custom_call.1} parent=5 // pred_fallthru
        _
      %p319 = scmp.le.s32.totalorder 2, %s20
      // Predicated region
      $region45: #{tpu_custom_call.1} parent=5 // pred_check
        %p320 = pneg %p319
      $region46: #{tpu_custom_call.1} parent=5 // pred_check_branch
        %322 = sbr.rel (%p320) target = $region48
      $region47: #{tpu_custom_call.1} parent=5 // pred_region
        %s323 = ssub.s32 %s20, 2
        // Predicated region
        $region49: #{tpu_custom_call.1} parent=47 // pred_check
          %p324 = pneg %p96
        $region50: #{tpu_custom_call.1} parent=47 // pred_check_branch
          %326 = sbr.rel (%p324) target = $region52
        $region51: #{tpu_custom_call.1} parent=47 // pred_region
          %s327 = sand.u32 %s81, 1
          %s328 = scalar_lea.sflag [#allocation4], %s327
          %s329 = sand.u32 %s81, 1
          %s330 = smul.addr %s329, 32
          %s331 = scalar_lea.vmem [#allocation7], %s330
          %333 = dma.done %s328, 512
        $region52: #{tpu_custom_call.1} parent=47 // pred_fallthru
          _
        // Predicated region
        $region53: #{tpu_custom_call.1} parent=47 // pred_check
          %p334 = pneg %p122
        $region54: #{tpu_custom_call.1} parent=47 // pred_check_branch
          %336 = sbr.rel (%p334) target = $region56
        $region55: #{tpu_custom_call.1} parent=47 // pred_region
          %s337 = sand.u32 %s107, 1
          %s338 = scalar_lea.sflag [#allocation9], %s337
          %s339 = sand.u32 %s107, 1
          %s340 = smul.addr %s339, 8
          %s341 = scalar_lea.vmem [#allocation8], %s340
          %343 = dma.done %s338, 128
        $region56: #{tpu_custom_call.1} parent=47 // pred_fallthru
          _
      $region48: #{tpu_custom_call.1} parent=5 // pred_fallthru
        _
    $region6: #{tpu_custom_call.1} parent=1 // loop_footer
      %s24 = sadd.s32 1, %s20
    $region7: #{tpu_custom_call.1} parent=1 // loop_footer_branch
      %19 = sbr.rel target = $region3
    $region8: #{tpu_custom_call.1} parent=1 // loop_exit
      _
    %344 = vsyncpa [#allocation3], 1
    %s345 = scalar_lea.sflag [#allocation3], 1
    %346 = vsyncpa %s345, 1
    %347 = vsyncpa [#allocation6], 1
    %s348 = scalar_lea.sflag [#allocation6], 1
    %349 = vsyncpa %s348, 1
    %350 = vsyncpa [#allocation4], 1
    %s351 = scalar_lea.sflag [#allocation4], 1
    %352 = vsyncpa %s351, 1
    %353 = vsyncpa [#allocation9], 1
    %s354 = scalar_lea.sflag [#allocation9], 1
    %355 = vsyncpa %s354, 1

</llo_original>
